<compile_context>
chip_gen: v7x
topology: tpu7x:2x2x1
jax: 0.10.0
libtpu: 0.0.40
codegen_flags: <defaults>
</compile_context>

<pallas_src>
import functools

import jax
import jax.numpy as jnp
from jax.experimental import pallas as pl
from jax.experimental.pallas import tpu as pltpu


def double_conv_kernel(xp_ref, m1_ref, t1_ref, m2_ref, t2_ref, mi_ref, ti_ref,
                       out_ref, *, H, WCout):
    xp = xp_ref[0]                                       # (H+2, W*Cin), bf16

    # ---- conv1 (3x3, pad=1) + BN1 (scale folded into m1) + ReLU -------------
    acc1 = jnp.dot(xp[0:H, :],     m1_ref[0], preferred_element_type=jnp.float32)
    acc1 += jnp.dot(xp[1:H + 1, :], m1_ref[1], preferred_element_type=jnp.float32)
    acc1 += jnp.dot(xp[2:H + 2, :], m1_ref[2], preferred_element_type=jnp.float32)
    h1 = jnp.maximum(acc1 + t1_ref[...], 0.0)            # (H, W*Cout), f32

    # ---- conv2 (3x3, pad=1) + BN2 + ReLU ------------------------------------
    # Only the H halo needs explicit zeros (W boundary is inside the band
    # structure of m2); keep it in vregs, no padded VMEM scratch.
    h1b = h1.astype(jnp.bfloat16)
    zrow = jnp.zeros((1, WCout), jnp.bfloat16)
    h1p = jnp.concatenate([zrow, h1b, zrow], axis=0)     # (H+2, W*Cout)
    acc2 = jnp.dot(h1p[0:H, :],     m2_ref[0], preferred_element_type=jnp.float32)
    acc2 += jnp.dot(h1p[1:H + 1, :], m2_ref[1], preferred_element_type=jnp.float32)
    acc2 += jnp.dot(h1p[2:H + 2, :], m2_ref[2], preferred_element_type=jnp.float32)
    out_dc = jnp.maximum(acc2 + t2_ref[...], 0.0)

    # ---- identity path: 1x1 conv (block-diagonal banded matmul) + BN --------
    ident = jnp.dot(xp[1:H + 1, :], mi_ref[...], preferred_element_type=jnp.float32)
    ident = ident + ti_ref[...]

    # ---- residual add + final ReLU (lane-dense (H, W*Cout) store) -----------
    out_ref[0] = jnp.maximum(out_dc + ident, 0.0)


def double_conv_forward(x_nchw, p, eps=1e-5):
    B, Cin, H, W = x_nchw.shape
    Cout = p["w1"].shape[0]
    WCin, WCout = W * Cin, W * Cout

    # ---- BN folding: scale into weights, shift kept as an additive row ------
    def bn_scale_shift(g, b, m, v, conv_bias=None):
        s = g / jnp.sqrt(v + eps)
        t = b - m * s
        if conv_bias is not None:
            t = t + conv_bias * s
        return s, t

    s1, t1 = bn_scale_shift(p["bn1_g"], p["bn1_b"], p["bn1_m"], p["bn1_v"], p["b1"])
    s2, t2 = bn_scale_shift(p["bn2_g"], p["bn2_b"], p["bn2_m"], p["bn2_v"], p["b2"])
    si, ti = bn_scale_shift(p["bni_g"], p["bni_b"], p["bni_m"], p["bni_v"], None)

    # ---- build banded weight matrices (conv-as-matmul along the W axis) -----
    # For row-tap dh, M[dh][(w+dw-1)*Cin + ci, w*Cout + co] = w[co, ci, dh, dw] * s[co]
    # (taps that fall outside [0, W) are simply omitted => W padding handled).
    def banded_3x3(w_oihw, scale):
        o, i = w_oihw.shape[:2]
        w = w_oihw * scale[:, None, None, None]
        mats = []
        for dh in range(3):
            m = jnp.zeros((W, i, W, o), jnp.float32)
            for dw in range(3):
                ind = jnp.eye(W, k=-(dw - 1), dtype=jnp.float32)   # ind[src,dst]
                m = m + jnp.einsum("sd,oi->sido", ind, w[:, :, dh, dw])
            mats.append(m.reshape(W * i, W * o))
        return jnp.stack(mats, 0)                                   # (3, W*i, W*o)

    def banded_1x1(w_oi11, scale):
        o, i = w_oi11.shape[:2]
        w = w_oi11[:, :, 0, 0] * scale[:, None]
        m = jnp.einsum("sd,oi->sido", jnp.eye(W, dtype=jnp.float32), w)
        return m.reshape(W * i, W * o)                              # (W*i, W*o)

    m1 = banded_3x3(p["w1"], s1).astype(jnp.bfloat16)   # (3, W*Cin,  W*Cout)
    m2 = banded_3x3(p["w2"], s2).astype(jnp.bfloat16)   # (3, W*Cout, W*Cout)
    mi = banded_1x1(p["wi"], si).astype(jnp.bfloat16)   # (W*Cin, W*Cout)

    def tile_shift(t):
        return jnp.tile(t, W).reshape(1, WCout).astype(jnp.float32)

    t1_row, t2_row, ti_row = tile_shift(t1), tile_shift(t2), tile_shift(ti)

    # ---- input layout: NCHW -> NHWC -> H-pad by 1 -> fold W into lanes ------
    x = jnp.transpose(x_nchw, (0, 2, 3, 1))                       # (B, H, W, Cin)
    xp = jnp.pad(x, ((0, 0), (1, 1), (0, 0), (0, 0)))             # (B, H+2, W, Cin)
    xp = xp.reshape(B, H + 2, WCin).astype(jnp.bfloat16)          # (B, H+2, W*Cin)

    kernel = functools.partial(double_conv_kernel, H=H, WCout=WCout)

    # VMEM budget: double-buffered in/out tiles + resident weights, with headroom.
    vmem_need = (2 * (H + 2) * WCin * 2          # input tile (bf16) x2
                 + 2 * H * WCout * 4             # output tile (f32) x2
                 + (3 * WCin + 3 * WCout + WCin) * WCout * 2   # m1, m2, mi (bf16)
                 + 3 * WCout * 4)                # shift rows (f32)
    vmem_limit = max(4 * vmem_need, 8 * 1024 * 1024)

    out_flat = pl.pallas_call(
        kernel,
        out_shape=jax.ShapeDtypeStruct((B, H, WCout), jnp.float32),
        grid=(B,),
        in_specs=[
            pl.BlockSpec((1, H + 2, WCin), lambda b: (b, 0, 0)),
            pl.BlockSpec((3, WCin, WCout), lambda b: (0, 0, 0)),
            pl.BlockSpec((1, WCout), lambda b: (0, 0)),
            pl.BlockSpec((3, WCout, WCout), lambda b: (0, 0, 0)),
            pl.BlockSpec((1, WCout), lambda b: (0, 0)),
            pl.BlockSpec((WCin, WCout), lambda b: (0, 0)),
            pl.BlockSpec((1, WCout), lambda b: (0, 0)),
        ],
        out_specs=pl.BlockSpec((1, H, WCout), lambda b: (b, 0, 0)),
        compiler_params=pltpu.CompilerParams(
            dimension_semantics=("parallel",),
            vmem_limit_bytes=int(vmem_limit)),
    )(xp, m1, t1_row, m2, t2_row, mi, ti_row)

    out = out_flat.reshape(B, H, W, Cout)
    return jnp.transpose(out, (0, 3, 1, 2))                       # back to NCHW


# ---------------- pure-JAX reference (eval-mode BN), for validation ----------------
def ref_forward(x_nchw, p, eps=1e-5):
    def conv(x, w, b=None, pad=1):
        y = jax.lax.conv_general_dilated(
            x, w, (1, 1), ((pad, pad), (pad, pad)),
            dimension_numbers=("NCHW", "OIHW", "NCHW"))
        if b is not None:
            y = y + b[None, :, None, None]
        return y

    def bn(x, g, b, m, v):
        return (x - m[None, :, None, None]) / jnp.sqrt(v[None, :, None, None] + eps) \
               * g[None, :, None, None] + b[None, :, None, None]

    h = jax.nn.relu(bn(conv(x_nchw, p["w1"], p["b1"], 1),
                       p["bn1_g"], p["bn1_b"], p["bn1_m"], p["bn1_v"]))
    h = jax.nn.relu(bn(conv(h, p["w2"], p["b2"], 1),
                       p["bn2_g"], p["bn2_b"], p["bn2_m"], p["bn2_v"]))
    ident = bn(conv(x_nchw, p["wi"], None, 0),
               p["bni_g"], p["bni_b"], p["bni_m"], p["bni_v"])
    return jax.nn.relu(h + ident)


if __name__ == "__main__":
    B, Cin, Cout, H, W = 2, 4, 8, 16, 16

    key = jax.random.PRNGKey(0)
    ks = jax.random.split(key, 20)

    def n(i, shape, scale=0.1):
        return scale * jax.random.normal(ks[i], shape, jnp.float32)

    params = {
        # conv1: 3x3, in->out, with bias
        "w1": n(0, (Cout, Cin, 3, 3)), "b1": n(1, (Cout,)),
        "bn1_g": 1.0 + n(2, (Cout,)), "bn1_b": n(3, (Cout,)),
        "bn1_m": n(4, (Cout,)), "bn1_v": 0.5 + jnp.abs(n(5, (Cout,), 1.0)),
        # conv2: 3x3, out->out, with bias
        "w2": n(6, (Cout, Cout, 3, 3)), "b2": n(7, (Cout,)),
        "bn2_g": 1.0 + n(8, (Cout,)), "bn2_b": n(9, (Cout,)),
        "bn2_m": n(10, (Cout,)), "bn2_v": 0.5 + jnp.abs(n(11, (Cout,), 1.0)),
        # identity: 1x1, in->out, no bias
        "wi": n(12, (Cout, Cin, 1, 1)),
        "bni_g": 1.0 + n(13, (Cout,)), "bni_b": n(14, (Cout,)),
        "bni_m": n(15, (Cout,)), "bni_v": 0.5 + jnp.abs(n(16, (Cout,), 1.0)),
    }

    x = jax.random.normal(ks[19], (B, Cin, H, W), jnp.float32)

    out = jax.block_until_ready(double_conv_forward(x, params))
    ref = jax.block_until_ready(ref_forward(x, params))

    assert out.shape == (B, Cout, H, W), out.shape
    # bf16 MXU operands with f32 accumulation -> loosened tolerance vs f32 reference.
    if not bool(jnp.allclose(out, ref, atol=3e-2, rtol=3e-2)):
        raise AssertionError(
            f"kernel/reference mismatch, max abs err = {jnp.max(jnp.abs(out - ref))}")

    print("KERNEL_OK")
</pallas_src>

<mosaic_0001>
module attributes {stable_mosaic.version = 11 : i64} {
  func.func @double_conv_kernel(%arg0: i32, %arg1: memref<1x18x64xbf16, #tpu.memory_space<vmem>>, %arg2: memref<3x64x128xbf16, #tpu.memory_space<vmem>>, %arg3: memref<1x128xf32, #tpu.memory_space<vmem>>, %arg4: memref<3x128x128xbf16, #tpu.memory_space<vmem>>, %arg5: memref<1x128xf32, #tpu.memory_space<vmem>>, %arg6: memref<64x128xbf16, #tpu.memory_space<vmem>>, %arg7: memref<1x128xf32, #tpu.memory_space<vmem>>, %arg8: memref<1x16x128xf32, #tpu.memory_space<vmem>>) attributes {dimension_semantics = [#tpu.dimension_semantics<parallel>], iteration_bounds = array<i64: 2>, scalar_prefetch = 0 : i64, scratch_operands = 0 : i64, tpu.core_type = #tpu.core_type<tc>, window_params = [{transform_indices = @transform_0, window_bounds = array<i64: 1, 18, 64>}, {pipeline_mode = #tpu.pipeline_mode<synchronous>, transform_indices = @transform_1, window_bounds = array<i64: 3, 64, 128>}, {pipeline_mode = #tpu.pipeline_mode<synchronous>, transform_indices = @transform_2, window_bounds = array<i64: 1, 128>}, {pipeline_mode = #tpu.pipeline_mode<synchronous>, transform_indices = @transform_3, window_bounds = array<i64: 3, 128, 128>}, {pipeline_mode = #tpu.pipeline_mode<synchronous>, transform_indices = @transform_4, window_bounds = array<i64: 1, 128>}, {pipeline_mode = #tpu.pipeline_mode<synchronous>, transform_indices = @transform_5, window_bounds = array<i64: 64, 128>}, {pipeline_mode = #tpu.pipeline_mode<synchronous>, transform_indices = @transform_6, window_bounds = array<i64: 1, 128>}, {transform_indices = @transform_7, window_bounds = array<i64: 1, 16, 128>}]} {
    %c0 = arith.constant 0 : index
    %c0_0 = arith.constant 0 : index
    %c0_1 = arith.constant 0 : index
    %0 = vector.load %arg1[%c0, %c0_0, %c0_1] : memref<1x18x64xbf16, #tpu.memory_space<vmem>>, vector<1x18x64xbf16>
    %1 = vector.shape_cast %0 : vector<1x18x64xbf16> to vector<18x64xbf16>
    %2 = vector.extract_strided_slice %1 {offsets = [0, 0], sizes = [16, 64], strides = [1, 1]} : vector<18x64xbf16> to vector<16x64xbf16>
    %c0_2 = arith.constant 0 : index
    %c0_3 = arith.constant 0 : index
    %c0_4 = arith.constant 0 : index
    %3 = vector.load %arg2[%c0_2, %c0_3, %c0_4] : memref<3x64x128xbf16, #tpu.memory_space<vmem>>, vector<1x64x128xbf16>
    %4 = vector.shape_cast %3 : vector<1x64x128xbf16> to vector<64x128xbf16>
    %cst = arith.constant dense<0.000000e+00> : vector<16x128xf32>
    %5 = tpu.matmul %2, %4, %cst {dimension_numbers = #tpu.dot_dimension_numbers<[1], [0], [0], [1], [0, 0, 1, 1], [], []>} : vector<16x64xbf16>, vector<64x128xbf16>, vector<16x128xf32> -> vector<16x128xf32>
    %6 = vector.extract_strided_slice %1 {offsets = [1, 0], sizes = [16, 64], strides = [1, 1]} : vector<18x64xbf16> to vector<16x64xbf16>
    %c1 = arith.constant 1 : index
    %c0_5 = arith.constant 0 : index
    %c0_6 = arith.constant 0 : index
    %7 = vector.load %arg2[%c1, %c0_5, %c0_6] : memref<3x64x128xbf16, #tpu.memory_space<vmem>>, vector<1x64x128xbf16>
    %8 = vector.shape_cast %7 : vector<1x64x128xbf16> to vector<64x128xbf16>
    %cst_7 = arith.constant dense<0.000000e+00> : vector<16x128xf32>
    %9 = tpu.matmul %6, %8, %cst_7 {dimension_numbers = #tpu.dot_dimension_numbers<[1], [0], [0], [1], [0, 0, 1, 1], [], []>} : vector<16x64xbf16>, vector<64x128xbf16>, vector<16x128xf32> -> vector<16x128xf32>
    %10 = arith.addf %5, %9 : vector<16x128xf32>
    %11 = vector.extract_strided_slice %1 {offsets = [2, 0], sizes = [16, 64], strides = [1, 1]} : vector<18x64xbf16> to vector<16x64xbf16>
    %c2 = arith.constant 2 : index
    %c0_8 = arith.constant 0 : index
    %c0_9 = arith.constant 0 : index
    %12 = vector.load %arg2[%c2, %c0_8, %c0_9] : memref<3x64x128xbf16, #tpu.memory_space<vmem>>, vector<1x64x128xbf16>
    %13 = vector.shape_cast %12 : vector<1x64x128xbf16> to vector<64x128xbf16>
    %cst_10 = arith.constant dense<0.000000e+00> : vector<16x128xf32>
    %14 = tpu.matmul %11, %13, %cst_10 {dimension_numbers = #tpu.dot_dimension_numbers<[1], [0], [0], [1], [0, 0, 1, 1], [], []>} : vector<16x64xbf16>, vector<64x128xbf16>, vector<16x128xf32> -> vector<16x128xf32>
    %15 = arith.addf %10, %14 : vector<16x128xf32>
    %c0_11 = arith.constant 0 : index
    %c0_12 = arith.constant 0 : index
    %16 = vector.load %arg3[%c0_11, %c0_12] : memref<1x128xf32, #tpu.memory_space<vmem>>, vector<1x128xf32>
    %17 = vector.broadcast %16 : vector<1x128xf32> to vector<16x128xf32>
    %18 = arith.addf %15, %17 : vector<16x128xf32>
    %cst_13 = arith.constant 0.000000e+00 : f32
    %19 = vector.broadcast %cst_13 : f32 to vector<16x128xf32>
    %20 = arith.maximumf %18, %19 : vector<16x128xf32>
    %21 = arith.truncf %20 : vector<16x128xf32> to vector<16x128xbf16>
    %cst_14 = arith.constant 0.000000e+00 : bf16
    %22 = vector.broadcast %cst_14 : bf16 to vector<1x128xbf16>
    %23 = tpu.concatenate %22, %21, %22 in 0 : vector<1x128xbf16>, vector<16x128xbf16>, vector<1x128xbf16> -> vector<18x128xbf16>
    %24 = vector.extract_strided_slice %23 {offsets = [0, 0], sizes = [16, 128], strides = [1, 1]} : vector<18x128xbf16> to vector<16x128xbf16>
    %c0_15 = arith.constant 0 : index
    %c0_16 = arith.constant 0 : index
    %c0_17 = arith.constant 0 : index
    %25 = vector.load %arg4[%c0_15, %c0_16, %c0_17] : memref<3x128x128xbf16, #tpu.memory_space<vmem>>, vector<1x128x128xbf16>
    %26 = vector.shape_cast %25 : vector<1x128x128xbf16> to vector<128x128xbf16>
    %cst_18 = arith.constant dense<0.000000e+00> : vector<16x128xf32>
    %27 = tpu.matmul %24, %26, %cst_18 {dimension_numbers = #tpu.dot_dimension_numbers<[1], [0], [0], [1], [0, 0, 1, 1], [], []>} : vector<16x128xbf16>, vector<128x128xbf16>, vector<16x128xf32> -> vector<16x128xf32>
    %28 = vector.extract_strided_slice %23 {offsets = [1, 0], sizes = [16, 128], strides = [1, 1]} : vector<18x128xbf16> to vector<16x128xbf16>
    %c1_19 = arith.constant 1 : index
    %c0_20 = arith.constant 0 : index
    %c0_21 = arith.constant 0 : index
    %29 = vector.load %arg4[%c1_19, %c0_20, %c0_21] : memref<3x128x128xbf16, #tpu.memory_space<vmem>>, vector<1x128x128xbf16>
    %30 = vector.shape_cast %29 : vector<1x128x128xbf16> to vector<128x128xbf16>
    %cst_22 = arith.constant dense<0.000000e+00> : vector<16x128xf32>
    %31 = tpu.matmul %28, %30, %cst_22 {dimension_numbers = #tpu.dot_dimension_numbers<[1], [0], [0], [1], [0, 0, 1, 1], [], []>} : vector<16x128xbf16>, vector<128x128xbf16>, vector<16x128xf32> -> vector<16x128xf32>
    %32 = arith.addf %27, %31 : vector<16x128xf32>
    %33 = vector.extract_strided_slice %23 {offsets = [2, 0], sizes = [16, 128], strides = [1, 1]} : vector<18x128xbf16> to vector<16x128xbf16>
    %c2_23 = arith.constant 2 : index
    %c0_24 = arith.constant 0 : index
    %c0_25 = arith.constant 0 : index
    %34 = vector.load %arg4[%c2_23, %c0_24, %c0_25] : memref<3x128x128xbf16, #tpu.memory_space<vmem>>, vector<1x128x128xbf16>
    %35 = vector.shape_cast %34 : vector<1x128x128xbf16> to vector<128x128xbf16>
    %cst_26 = arith.constant dense<0.000000e+00> : vector<16x128xf32>
    %36 = tpu.matmul %33, %35, %cst_26 {dimension_numbers = #tpu.dot_dimension_numbers<[1], [0], [0], [1], [0, 0, 1, 1], [], []>} : vector<16x128xbf16>, vector<128x128xbf16>, vector<16x128xf32> -> vector<16x128xf32>
    %37 = arith.addf %32, %36 : vector<16x128xf32>
    %c0_27 = arith.constant 0 : index
    %c0_28 = arith.constant 0 : index
    %38 = vector.load %arg5[%c0_27, %c0_28] : memref<1x128xf32, #tpu.memory_space<vmem>>, vector<1x128xf32>
    %39 = vector.broadcast %38 : vector<1x128xf32> to vector<16x128xf32>
    %40 = arith.addf %37, %39 : vector<16x128xf32>
    %cst_29 = arith.constant 0.000000e+00 : f32
    %41 = vector.broadcast %cst_29 : f32 to vector<16x128xf32>
    %42 = arith.maximumf %40, %41 : vector<16x128xf32>
    %43 = vector.extract_strided_slice %1 {offsets = [1, 0], sizes = [16, 64], strides = [1, 1]} : vector<18x64xbf16> to vector<16x64xbf16>
    %c0_30 = arith.constant 0 : index
    %c0_31 = arith.constant 0 : index
    %44 = vector.load %arg6[%c0_30, %c0_31] : memref<64x128xbf16, #tpu.memory_space<vmem>>, vector<64x128xbf16>
    %cst_32 = arith.constant dense<0.000000e+00> : vector<16x128xf32>
    %45 = tpu.matmul %43, %44, %cst_32 {dimension_numbers = #tpu.dot_dimension_numbers<[1], [0], [0], [1], [0, 0, 1, 1], [], []>} : vector<16x64xbf16>, vector<64x128xbf16>, vector<16x128xf32> -> vector<16x128xf32>
    %c0_33 = arith.constant 0 : index
    %c0_34 = arith.constant 0 : index
    %46 = vector.load %arg7[%c0_33, %c0_34] : memref<1x128xf32, #tpu.memory_space<vmem>>, vector<1x128xf32>
    %47 = vector.broadcast %46 : vector<1x128xf32> to vector<16x128xf32>
    %48 = arith.addf %45, %47 : vector<16x128xf32>
    %49 = arith.addf %42, %48 : vector<16x128xf32>
    %cst_35 = arith.constant 0.000000e+00 : f32
    %50 = vector.broadcast %cst_35 : f32 to vector<16x128xf32>
    %51 = arith.maximumf %49, %50 : vector<16x128xf32>
    %c0_36 = arith.constant 0 : index
    %c0_37 = arith.constant 0 : index
    %c0_38 = arith.constant 0 : index
    %52 = vector.load %arg8[%c0_36, %c0_37, %c0_38] : memref<1x16x128xf32, #tpu.memory_space<vmem>>, vector<1x16x128xf32>
    %53 = vector.shape_cast %52 : vector<1x16x128xf32> to vector<16x128xf32>
    %54 = vector.shape_cast %51 : vector<16x128xf32> to vector<1x16x128xf32>
    tpu.vector_store %arg8[%c0_36, %c0_37, %c0_38], %54 {strides = array<i32>} : memref<1x16x128xf32, #tpu.memory_space<vmem>>, vector<1x16x128xf32>,
    return
  }
  func.func @transform_0(%arg0: i32) -> (i32, i32, i32) {
    %c0_i32 = arith.constant 0 : i32
    %c0_i32_0 = arith.constant 0 : i32
    %c0_i32_1 = arith.constant 0 : i32
    return %arg0, %c0_i32, %c0_i32_0 : i32, i32, i32
  }
  func.func @transform_1(%arg0: i32) -> (i32, i32, i32) {
    %c0_i32 = arith.constant 0 : i32
    %c0_i32_0 = arith.constant 0 : i32
    %c0_i32_1 = arith.constant 0 : i32
    %c0_i32_2 = arith.constant 0 : i32
    return %c0_i32, %c0_i32_0, %c0_i32_1 : i32, i32, i32
  }
  func.func @transform_2(%arg0: i32) -> (i32, i32) {
    %c0_i32 = arith.constant 0 : i32
    %c0_i32_0 = arith.constant 0 : i32
    %c0_i32_1 = arith.constant 0 : i32
    return %c0_i32, %c0_i32_0 : i32, i32
  }
  func.func @transform_3(%arg0: i32) -> (i32, i32, i32) {
    %c0_i32 = arith.constant 0 : i32
    %c0_i32_0 = arith.constant 0 : i32
    %c0_i32_1 = arith.constant 0 : i32
    %c0_i32_2 = arith.constant 0 : i32
    return %c0_i32, %c0_i32_0, %c0_i32_1 : i32, i32, i32
  }
  func.func @transform_4(%arg0: i32) -> (i32, i32) {
    %c0_i32 = arith.constant 0 : i32
    %c0_i32_0 = arith.constant 0 : i32
    %c0_i32_1 = arith.constant 0 : i32
    return %c0_i32, %c0_i32_0 : i32, i32
  }
  func.func @transform_5(%arg0: i32) -> (i32, i32) {
    %c0_i32 = arith.constant 0 : i32
    %c0_i32_0 = arith.constant 0 : i32
    %c0_i32_1 = arith.constant 0 : i32
    return %c0_i32, %c0_i32_0 : i32, i32
  }
  func.func @transform_6(%arg0: i32) -> (i32, i32) {
    %c0_i32 = arith.constant 0 : i32
    %c0_i32_0 = arith.constant 0 : i32
    %c0_i32_1 = arith.constant 0 : i32
    return %c0_i32, %c0_i32_0 : i32, i32
  }
  func.func @transform_7(%arg0: i32) -> (i32, i32, i32) {
    %c0_i32 = arith.constant 0 : i32
    %c0_i32_0 = arith.constant 0 : i32
    %c0_i32_1 = arith.constant 0 : i32
    return %arg0, %c0_i32, %c0_i32_0 : i32, i32, i32
  }
}

</mosaic_0001>

<llo_original>
// kernel: tpu_custom_call.1
$region0: #{tpu_custom_call.1}
  #allocation0 [shape = 'u32[]', space=smem, size = 0x4, offset = 0x4, fixed_abs, tag = 'smem constant byte address 0x4 - core index']
  #allocation1 [shape = 'u32[144,128]{1,0:T(1,128)}', space=vmem, size = 0x12000, scoped, tag = 'internal scratch']
  %s0 = inlined_call_operand.vmem [shape: bf16[2,18,64], index: 0, kind: input, shape index: {}]
  %s1 = inlined_call_operand.hbm [shape: bf16[3,64,128], index: 1, kind: input, shape index: {}]
  %s2 = inlined_call_operand.vmem [shape: f32[1,128], index: 2, kind: input, shape index: {}]
  %s3 = inlined_call_operand.hbm [shape: bf16[3,128,128], index: 3, kind: input, shape index: {}]
  %s4 = inlined_call_operand.vmem [shape: f32[1,128], index: 4, kind: input, shape index: {}]
  %s5 = inlined_call_operand.vmem [shape: bf16[64,128], index: 5, kind: input, shape index: {}]
  %s6 = inlined_call_operand.vmem [shape: f32[1,128], index: 6, kind: input, shape index: {}]
  %s7 = inlined_call_operand.hbm [shape: f32[2,16,128], index: 7, kind: output, shape index: {}]
  %s8 = sld [smem:[#allocation0]]
  $region69: #{tpu_custom_call.1} parent=0
    _
  %s10 = ssub.s32 1, %s8
  %s11 = scalar_select 0, %s10, %s8
  $region1: #{tpu_custom_call.1} parent=0
    #allocation2 [shape = 'u8[49152]{0}', space=vmem, size = 0xc000, scoped, tag = 'input window, operand 1, single buffered']
    #allocation3 [shape = 's32[2]{0}', space=sflag, size = 0x8, scoped, tag = 'scoped memory for tpu_custom_call.1']
    #allocation4 [shape = 's32[2]{0}', space=sflag, size = 0x8, scoped, tag = 'scoped memory for tpu_custom_call.1']
    #allocation5 [shape = 'u8[98304]{0}', space=vmem, size = 0x18000, scoped, tag = 'input window, operand 3, single buffered']
    #allocation6 [shape = 's32[1]{0}', space=sflag, size = 0x4, scoped, tag = 'scoped memory for tpu_custom_call.1']
    #allocation7 [shape = 'u8[16384]{0}', space=vmem, size = 0x4000, scoped, tag = 'output window, operand 0']
    %12 = vsyncpa [#allocation3], 0
    %13 = vsyncpa [#allocation6], 0
    %14 = vsyncpa [#allocation4], 0
    %s15 = scalar_lea.sflag [#allocation4], 1
    %16 = vsyncpa %s15, 0
    loop: start=0, step=1, limit=4
    $region2: #{tpu_custom_call.1} parent=1 // loop_pre_header
      _
    $region3: #{tpu_custom_call.1} parent=1 // loop_header
      %s18 = sphi 0, %s22
      %p19 = scmp.ge.s32.totalorder %s18, 4
      %s28 = sphi 0, %s30
      %s31 = sphi 0, %s28
      %s32 = sphi 0, %s31
      %s48 = sphi 0, %s32
      %s52 = sphi 0, %s52
      %s54 = sphi 0, %s52
      %s55 = sphi 0, %s54
      %s69 = sphi 0, %s55
      %s73 = sphi 0, %s73
      %s75 = sphi 0, %s73
      %s76 = sphi 0, %s75
      %s90 = sphi 0, %s76
      %s94 = sphi 0, %s94
      %s96 = sphi 0, %s94
      %s97 = sphi 0, %s96
      %s111 = sphi 0, %s97
      %s115 = sphi 0, %s115
      %s117 = sphi 0, %s115
      %s118 = sphi 0, %s117
      %s132 = sphi 0, %s118
      %s136 = sphi 0, %s136
      %s138 = sphi 0, %s136
      %s139 = sphi 0, %s138
      %s153 = sphi 0, %s139
      %s157 = sphi 0, %s157
      %s159 = sphi 0, %s157
      %s160 = sphi 0, %s159
      %s174 = sphi 0, %s160
      %s180 = sphi 0, %s182
      %s183 = sphi 0, %s180
      %s184 = sphi 0, %s183
      %s200 = sphi 0, %s184
    $region4: #{tpu_custom_call.1} parent=1 // loop_header_branch
      %21 = sbr.rel (%p19) target = $region8
    $region5: #{tpu_custom_call.1} parent=1 // loop_body
      %s23 = ssub.s32 %s18, 1
      %s24 = ssub.s32 %s18, 2
      %s25 = sadd.s32 %s18, 1
      %s26 = ssub.s32 %s18, %s25
      %p27 = scmp.eq.s32.totalorder %s26, 0
      %s29 = sadd.s32 %s28, 1
      %s30 = scalar_select %p27, %s28, %s29
      %p33 = pneg %p27
      %p34 = scmp.eq.s32.totalorder %s18, 1
      %p35 = por %p33, %p34
      %p36 = scmp.ne.s32.totalorder %s28, %s31
      %p37 = scmp.eq.s32.totalorder %s18, 0
      %p38 = por %p36, %p37
      %p39 = scmp.ne.s32.totalorder %s28, %s31
      %p40 = scmp.eq.s32.totalorder %s23, 1
      %p41 = por %p39, %p40
      %p42 = scmp.ne.s32.totalorder %s31, %s32
      %p43 = scmp.eq.s32.totalorder %s23, 0
      %p44 = por %p42, %p43
      %p45 = scmp.ne.s32.totalorder %s31, %s32
      %p46 = scmp.eq.s32.totalorder %s24, 1
      %p47 = por %p45, %p46
      %p49 = scmp.ne.s32.totalorder %s32, %s48
      %p50 = scmp.eq.s32.totalorder %s24, 0
      %p51 = por %p49, %p50
      %s53 = sadd.s32 %s52, 1
      %p56 = scmp.eq.s32.totalorder %s18, 1
      %p57 = scmp.ne.s32.totalorder %s52, %s54
      %p58 = scmp.eq.s32.totalorder %s18, 0
      %p59 = por %p57, %p58
      %p60 = scmp.ne.s32.totalorder %s52, %s54
      %p61 = scmp.eq.s32.totalorder %s23, 1
      %p62 = por %p60, %p61
      %p63 = scmp.ne.s32.totalorder %s54, %s55
      %p64 = scmp.eq.s32.totalorder %s23, 0
      %p65 = por %p63, %p64
      %p66 = scmp.ne.s32.totalorder %s54, %s55
      %p67 = scmp.eq.s32.totalorder %s24, 1
      %p68 = por %p66, %p67
      %p70 = scmp.ne.s32.totalorder %s55, %s69
      %p71 = scmp.eq.s32.totalorder %s24, 0
      %p72 = por %p70, %p71
      %s74 = sadd.s32 %s73, 1
      %p77 = scmp.eq.s32.totalorder %s18, 1
      %p78 = scmp.ne.s32.totalorder %s73, %s75
      %p79 = scmp.eq.s32.totalorder %s18, 0
      %p80 = por %p78, %p79
      %p81 = scmp.ne.s32.totalorder %s73, %s75
      %p82 = scmp.eq.s32.totalorder %s23, 1
      %p83 = por %p81, %p82
      %p84 = scmp.ne.s32.totalorder %s75, %s76
      %p85 = scmp.eq.s32.totalorder %s23, 0
      %p86 = por %p84, %p85
      %p87 = scmp.ne.s32.totalorder %s75, %s76
      %p88 = scmp.eq.s32.totalorder %s24, 1
      %p89 = por %p87, %p88
      %p91 = scmp.ne.s32.totalorder %s76, %s90
      %p92 = scmp.eq.s32.totalorder %s24, 0
      %p93 = por %p91, %p92
      %s95 = sadd.s32 %s94, 1
      %p98 = scmp.eq.s32.totalorder %s18, 1
      %p99 = scmp.ne.s32.totalorder %s94, %s96
      %p100 = scmp.eq.s32.totalorder %s18, 0
      %p101 = por %p99, %p100
      %p102 = scmp.ne.s32.totalorder %s94, %s96
      %p103 = scmp.eq.s32.totalorder %s23, 1
      %p104 = por %p102, %p103
      %p105 = scmp.ne.s32.totalorder %s96, %s97
      %p106 = scmp.eq.s32.totalorder %s23, 0
      %p107 = por %p105, %p106
      %p108 = scmp.ne.s32.totalorder %s96, %s97
      %p109 = scmp.eq.s32.totalorder %s24, 1
      %p110 = por %p108, %p109
      %p112 = scmp.ne.s32.totalorder %s97, %s111
      %p113 = scmp.eq.s32.totalorder %s24, 0
      %p114 = por %p112, %p113
      %s116 = sadd.s32 %s115, 1
      %p119 = scmp.eq.s32.totalorder %s18, 1
      %p120 = scmp.ne.s32.totalorder %s115, %s117
      %p121 = scmp.eq.s32.totalorder %s18, 0
      %p122 = por %p120, %p121
      %p123 = scmp.ne.s32.totalorder %s115, %s117
      %p124 = scmp.eq.s32.totalorder %s23, 1
      %p125 = por %p123, %p124
      %p126 = scmp.ne.s32.totalorder %s117, %s118
      %p127 = scmp.eq.s32.totalorder %s23, 0
      %p128 = por %p126, %p127
      %p129 = scmp.ne.s32.totalorder %s117, %s118
      %p130 = scmp.eq.s32.totalorder %s24, 1
      %p131 = por %p129, %p130
      %p133 = scmp.ne.s32.totalorder %s118, %s132
      %p134 = scmp.eq.s32.totalorder %s24, 0
      %p135 = por %p133, %p134
      %s137 = sadd.s32 %s136, 1
      %p140 = scmp.eq.s32.totalorder %s18, 1
      %p141 = scmp.ne.s32.totalorder %s136, %s138
      %p142 = scmp.eq.s32.totalorder %s18, 0
      %p143 = por %p141, %p142
      %p144 = scmp.ne.s32.totalorder %s136, %s138
      %p145 = scmp.eq.s32.totalorder %s23, 1
      %p146 = por %p144, %p145
      %p147 = scmp.ne.s32.totalorder %s138, %s139
      %p148 = scmp.eq.s32.totalorder %s23, 0
      %p149 = por %p147, %p148
      %p150 = scmp.ne.s32.totalorder %s138, %s139
      %p151 = scmp.eq.s32.totalorder %s24, 1
      %p152 = por %p150, %p151
      %p154 = scmp.ne.s32.totalorder %s139, %s153
      %p155 = scmp.eq.s32.totalorder %s24, 0
      %p156 = por %p154, %p155
      %s158 = sadd.s32 %s157, 1
      %p161 = scmp.eq.s32.totalorder %s18, 1
      %p162 = scmp.ne.s32.totalorder %s157, %s159
      %p163 = scmp.eq.s32.totalorder %s18, 0
      %p164 = por %p162, %p163
      %p165 = scmp.ne.s32.totalorder %s157, %s159
      %p166 = scmp.eq.s32.totalorder %s23, 1
      %p167 = por %p165, %p166
      %p168 = scmp.ne.s32.totalorder %s159, %s160
      %p169 = scmp.eq.s32.totalorder %s23, 0
      %p170 = por %p168, %p169
      %p171 = scmp.ne.s32.totalorder %s159, %s160
      %p172 = scmp.eq.s32.totalorder %s24, 1
      %p173 = por %p171, %p172
      %p175 = scmp.ne.s32.totalorder %s160, %s174
      %p176 = scmp.eq.s32.totalorder %s24, 0
      %p177 = por %p175, %p176
      %s178 = ssub.s32 %s18, %s25
      %p179 = scmp.eq.s32.totalorder %s178, 0
      %s181 = sadd.s32 %s180, 1
      %s182 = scalar_select %p179, %s180, %s181
      %p185 = pneg %p179
      %p186 = scmp.eq.s32.totalorder %s18, 1
      %p187 = por %p185, %p186
      %p188 = scmp.ne.s32.totalorder %s180, %s183
      %p189 = scmp.eq.s32.totalorder %s18, 0
      %p190 = por %p188, %p189
      %p191 = scmp.ne.s32.totalorder %s180, %s183
      %p192 = scmp.eq.s32.totalorder %s23, 1
      %p193 = por %p191, %p192
      %p194 = scmp.ne.s32.totalorder %s183, %s184
      %p195 = scmp.eq.s32.totalorder %s23, 0
      %p196 = por %p194, %p195
      %p197 = scmp.ne.s32.totalorder %s183, %s184
      %p198 = scmp.eq.s32.totalorder %s24, 1
      %p199 = por %p197, %p198
      %p201 = scmp.ne.s32.totalorder %s184, %s200
      %p202 = scmp.eq.s32.totalorder %s24, 0
      %p203 = por %p201, %p202
      %p204 = scmp.le.s32.totalorder 1, %s18
      %p205 = scmp.lt.s32.totalorder %s18, 3
      %p206 = pnand %p204, %p205
      %p207 = pneg %p206
      // Predicated region
      $region9: #{tpu_custom_call.1} parent=5 // pred_check
        _
      $region10: #{tpu_custom_call.1} parent=5 // pred_check_branch
        %209 = sbr.rel (%p206) target = $region12
      $region11: #{tpu_custom_call.1} parent=5 // pred_region
        %s210 = ssub.s32 %s18, 1
        // Predicated region
        $region13: #{tpu_custom_call.1} parent=11 // pred_check
          %p211 = pneg %p65
        $region14: #{tpu_custom_call.1} parent=11 // pred_check_branch
          %213 = sbr.rel (%p211) target = $region16
        $region15: #{tpu_custom_call.1} parent=11 // pred_region
          %s215 = ssub.s32 1536, 1536
          %216 = vsyncadd [#allocation3], %s215
          %s217 = sshll.u32 [#allocation2], 4
          %s218 = int_to_ptr.vmem [resolvable:$true] %s217
          %223 = dma.hbm_to_vmem [thread:$0]  %s1, 1536, %s218, [#allocation3], 64, 64, 4
        $region16: #{tpu_custom_call.1} parent=11 // pred_fallthru
          _
        // Predicated region
        $region17: #{tpu_custom_call.1} parent=11 // pred_check
          %p224 = pneg %p86
        $region18: #{tpu_custom_call.1} parent=11 // pred_check_branch
          %226 = sbr.rel (%p224) target = $region20
        $region19: #{tpu_custom_call.1} parent=11 // pred_region
          _
        $region20: #{tpu_custom_call.1} parent=11 // pred_fallthru
          _
        // Predicated region
        $region21: #{tpu_custom_call.1} parent=11 // pred_check
          %p227 = pneg %p107
        $region22: #{tpu_custom_call.1} parent=11 // pred_check_branch
          %229 = sbr.rel (%p227) target = $region24
        $region23: #{tpu_custom_call.1} parent=11 // pred_region
          %s231 = ssub.s32 3072, 3072
          %232 = vsyncadd [#allocation6], %s231
          %s233 = sshll.u32 [#allocation5], 4
          %s234 = int_to_ptr.vmem [resolvable:$true] %s233
          %239 = dma.hbm_to_vmem [thread:$0]  %s3, 3072, %s234, [#allocation6], 64, 64, 4
        $region24: #{tpu_custom_call.1} parent=11 // pred_fallthru
          _
        // Predicated region
        $region25: #{tpu_custom_call.1} parent=11 // pred_check
          %p240 = pneg %p128
        $region26: #{tpu_custom_call.1} parent=11 // pred_check_branch
          %242 = sbr.rel (%p240) target = $region28
        $region27: #{tpu_custom_call.1} parent=11 // pred_region
          _
        $region28: #{tpu_custom_call.1} parent=11 // pred_fallthru
          _
        // Predicated region
        $region29: #{tpu_custom_call.1} parent=11 // pred_check
          %p243 = pneg %p149
        $region30: #{tpu_custom_call.1} parent=11 // pred_check_branch
          %245 = sbr.rel (%p243) target = $region32
        $region31: #{tpu_custom_call.1} parent=11 // pred_region
          _
        $region32: #{tpu_custom_call.1} parent=11 // pred_fallthru
          _
        // Predicated region
        $region33: #{tpu_custom_call.1} parent=11 // pred_check
          %p246 = pneg %p170
        $region34: #{tpu_custom_call.1} parent=11 // pred_check_branch
          %248 = sbr.rel (%p246) target = $region36
        $region35: #{tpu_custom_call.1} parent=11 // pred_region
          _
        $region36: #{tpu_custom_call.1} parent=11 // pred_fallthru
          _
      $region12: #{tpu_custom_call.1} parent=5 // pred_fallthru
        _
      %p249 = scmp.lt.s32.totalorder %s18, 2
      // Predicated region
      $region37: #{tpu_custom_call.1} parent=5 // pred_check
        %p250 = pneg %p249
      $region38: #{tpu_custom_call.1} parent=5 // pred_check_branch
        %252 = sbr.rel (%p250) target = $region40
      $region39: #{tpu_custom_call.1} parent=5 // pred_region
        // Predicated region
        $region41: #{tpu_custom_call.1} parent=39 // pred_check
          %p253 = pneg %p38
        $region42: #{tpu_custom_call.1} parent=39 // pred_check_branch
          %255 = sbr.rel (%p253) target = $region44
        $region43: #{tpu_custom_call.1} parent=39 // pred_region
          %p256 = scmp.lt.s32.totalorder %s18, 1
          %s257 = scalar_select %p256, %s18, 1
          %s258 = smul.addr %s257, 3
          %s259 = smul.addr %s258, 4
          %s260 = scalar_lea.vmem %s0, %s259
        $region44: #{tpu_custom_call.1} parent=39 // pred_fallthru
          _
      $region40: #{tpu_custom_call.1} parent=5 // pred_fallthru
        _
      %p261 = scmp.le.s32.totalorder 1, %s18
      %p262 = scmp.lt.s32.totalorder %s18, 3
      %p263 = pnand %p261, %p262
      %p264 = pneg %p263
      // Predicated region
      $region45: #{tpu_custom_call.1} parent=5 // pred_check
        _
      $region46: #{tpu_custom_call.1} parent=5 // pred_check_branch
        %266 = sbr.rel (%p263) target = $region48
      $region47: #{tpu_custom_call.1} parent=5 // pred_region
        %s267 = ssub.s32 %s18, 1
        // Predicated region
        $region49: #{tpu_custom_call.1} parent=47 // pred_check
          %p268 = pneg %p65
        $region50: #{tpu_custom_call.1} parent=47 // pred_check_branch
          %270 = sbr.rel (%p268) target = $region52
        $region51: #{tpu_custom_call.1} parent=47 // pred_region
          %271 = dma.done [#allocation3], 1536
        $region52: #{tpu_custom_call.1} parent=47 // pred_fallthru
          _
        // Predicated region
        $region53: #{tpu_custom_call.1} parent=47 // pred_check
          %p272 = pneg %p107
        $region54: #{tpu_custom_call.1} parent=47 // pred_check_branch
          %274 = sbr.rel (%p272) target = $region56
        $region55: #{tpu_custom_call.1} parent=47 // pred_region
          %275 = dma.done [#allocation6], 3072
        $region56: #{tpu_custom_call.1} parent=47 // pred_fallthru
          _
        %p276 = scmp.lt.s32.totalorder %s23, 1
        %s277 = scalar_select %p276, %s23, 1
        %s278 = smul.addr %s277, 3
        %s279 = smul.addr %s278, 4
        %s280 = scalar_lea.vmem %s0, %s279
        %p281 = pneg %p44
        %p282 = pneg %p41
        %p283 = pneg %p65
        %p284 = pneg %p62
        %p285 = pneg %p86
        %p286 = pneg %p83
        %p287 = pneg %p107
        %p288 = pneg %p104
        %p289 = pneg %p128
        %p290 = pneg %p125
        %p291 = pneg %p149
        %p292 = pneg %p146
        %p293 = pneg %p170
        %p294 = pneg %p167
        %p295 = pneg %p196
        %p296 = pneg %p193
        %s297 = sand.u32 %s183, 1
        %s298 = scalar_lea.sflag [#allocation4], %s297
        %s299 = sand.u32 %s183, 1
        %s300 = smul.addr %s299, 16
        %s301 = scalar_lea.vmem [#allocation7], %s300
        %p302 = scmp.lt.s32.totalorder %s23, 1
        %s303 = scalar_select %p302, %s23, 1
        %s304 = smul.addr %s303, 3
        %s305 = smul.addr %s304, 4
        %s306 = scalar_lea.vmem %s0, %s305
        %v308 = vld [vmem:[%s306] sm:$0xf]
        %v309 = vld [vmem:[%s306 + $0x4] sm:$0xf]
        %v310 = vld [vmem:[%s306 + $0x8] sm:$0x1]
        %v311 = vld [vmem:[#allocation2] sm:$0xf]
        %v312 = vld [vmem:[#allocation2 + $0x4] sm:$0xf]
        %v313 = vld [vmem:[#allocation2 + $0x8] sm:$0xf]
        %v314 = vld [vmem:[#allocation2 + $0xc] sm:$0xf]
        %v315 = vld [vmem:[#allocation2 + $0x10] sm:$0xf]
        %v316 = vld [vmem:[#allocation2 + $0x14] sm:$0xf]
        %v317 = vld [vmem:[#allocation2 + $0x18] sm:$0xf]
        %v318 = vld [vmem:[#allocation2 + $0x1c] sm:$0xf]
        %s319 = scalar_lea.vmem [#allocation2], 32
        %v320 = vld [vmem:[%s319] sm:$0xf]
        %v321 = vld [vmem:[%s319 + $0x4] sm:$0xf]
        %v322 = vld [vmem:[%s319 + $0x8] sm:$0xf]
        %v323 = vld [vmem:[%s319 + $0xc] sm:$0xf]
        %v324 = vld [vmem:[%s319 + $0x10] sm:$0xf]
        %v325 = vld [vmem:[%s319 + $0x14] sm:$0xf]
        %v326 = vld [vmem:[%s319 + $0x18] sm:$0xf]
        %v327 = vld [vmem:[%s319 + $0x1c] sm:$0xf]
        %v331 = vunpack.c.l.b16 %v308
        %v332 = vunpack.c.l.b16 %v309
        %v333 = vunpack.c.l.b16 %v310
        %v334 = vpack.c.b16 %v332, %v331
        %v335 = vpack.c.b16 %v333, %v333
        %vm336 = vsmask.f32 7424
        %v338 = vshrl.u32 %v334, 16
        %v340 = vshll.u32 %v334, 16
        %v342 = vrot.slane %v340, 1
        %v343 = vor.u32 %v338, %v342
        %v345 = vshll.u32 %v335, 16
        %v347 = vrot.slane %v345, 1
        %v348 = vsel %vm336, %v343, %v347
        %v357 = vunpack.c.l.b16 %v320
        %v358 = vunpack.c.l.b16 %v321
        %v359 = vunpack.c.l.b16 %v322
        %v360 = vunpack.c.l.b16 %v323
        %v361 = vunpack.c.l.b16 %v324
        %v362 = vunpack.c.l.b16 %v325
        %v363 = vunpack.c.l.b16 %v326
        %v364 = vunpack.c.l.b16 %v327
        %v365 = vpack.c.b16 %v358, %v357
        %v366 = vpack.c.b16 %v360, %v359
        %v367 = vpack.c.b16 %v362, %v361
        %v368 = vpack.c.b16 %v364, %v363
        %vm373 = vcmask 523264
        %v375 = vsel %vm373, %v348, 0
        %377 = vmatprep.subr.bf16.mxu0 0
        %378 = vmatpush1.bf16.msra.mxu0 %v365
        %379 = vmatprep.subr.bf16.mxu0 0
        %380 = vmatpush1.bf16.msra.mxu0 %v366
        %381 = vmatprep.subr.bf16.mxu0 0
        %382 = vmatpush1.bf16.msra.mxu0 %v367
        %383 = vmatprep.subr.bf16.mxu0 0
        %384 = vmatpush1.bf16.msra.mxu0 %v368
        %385 = vmatprep.subr.bf16.mxu0 0
        %386 = vmatpush1.bf16.msra.mxu0 0
        %387 = vmatprep.subr.bf16.mxu0 0
        %388 = vmatpush1.bf16.msra.mxu0 0
        %389 = vmatprep.subr.bf16.mxu0 0
        %390 = vmatpush1.bf16.msra.mxu0 0
        %391 = vmatprep.subr.bf16.mxu0 0
        %392 = vmatpush1.bf16.msra.mxu0 0
        %393 = vmatprep.subr.bf16.mxu0 0
        %394 = vmatpush1.bf16.msra.mxu0 0
        %395 = vmatprep.subr.bf16.mxu0 0
        %396 = vmatpush1.bf16.msra.mxu0 0
        %397 = vmatprep.subr.bf16.mxu0 0
        %398 = vmatpush1.bf16.msra.mxu0 0
        %399 = vmatprep.subr.bf16.mxu0 0
        %400 = vmatpush1.bf16.msra.mxu0 0
        %401 = vmatprep.subr.bf16.mxu0 0
        %402 = vmatpush1.bf16.msra.mxu0 0
        %403 = vmatprep.subr.bf16.mxu0 0
        %404 = vmatpush1.bf16.msra.mxu0 0
        %405 = vmatprep.subr.bf16.mxu0 0
        %406 = vmatpush1.bf16.msra.mxu0 0
        %407 = vmatprep.subr.bf16.mxu0 0
        %408 = vmatpush1.bf16.msra.mxu0 0
        %409 = vmatprep.mubr.bf16.mxu0 0
        %410 = vmatmul.mubr.bf16.gmra.mrb[0].mxu0 %v375
        %v411 = vpop.f32.mrb[0].mxu0
        %v412 = vadd.f32 0.0, %v411
        %v413 = vpop.f32.mrb[0].mxu0
        %v414 = vpop.f32.mrb[0].mxu0
        %v415 = vadd.f32 0.0, %v414
        %v416 = vpop.f32.mrb[0].mxu0
        %417 = vdwg.mxu0
        %v426 = vunpack.c.l.b16 %v311
        %v427 = vunpack.c.l.b16 %v312
        %v428 = vunpack.c.l.b16 %v313
        %v429 = vunpack.c.l.b16 %v314
        %v430 = vunpack.c.l.b16 %v315
        %v431 = vunpack.c.l.b16 %v316
        %v432 = vunpack.c.l.b16 %v317
        %v433 = vunpack.c.l.b16 %v318
        %v434 = vpack.c.b16 %v427, %v426
        %v435 = vpack.c.b16 %v429, %v428
        %v436 = vpack.c.b16 %v431, %v430
        %v437 = vpack.c.b16 %v433, %v432
        %v442 = vsel %vm373, %v334, 0
        %444 = vmatprep.subr.bf16.mxu0 0
        %445 = vmatpush1.bf16.msra.mxu0 %v434
        %446 = vmatprep.subr.bf16.mxu0 0
        %447 = vmatpush1.bf16.msra.mxu0 %v435
        %448 = vmatprep.subr.bf16.mxu0 0
        %449 = vmatpush1.bf16.msra.mxu0 %v436
        %450 = vmatprep.subr.bf16.mxu0 0
        %451 = vmatpush1.bf16.msra.mxu0 %v437
        %452 = vmatprep.subr.bf16.mxu0 0
        %453 = vmatpush1.bf16.msra.mxu0 0
        %454 = vmatprep.subr.bf16.mxu0 0
        %455 = vmatpush1.bf16.msra.mxu0 0
        %456 = vmatprep.subr.bf16.mxu0 0
        %457 = vmatpush1.bf16.msra.mxu0 0
        %458 = vmatprep.subr.bf16.mxu0 0
        %459 = vmatpush1.bf16.msra.mxu0 0
        %460 = vmatprep.subr.bf16.mxu0 0
        %461 = vmatpush1.bf16.msra.mxu0 0
        %462 = vmatprep.subr.bf16.mxu0 0
        %463 = vmatpush1.bf16.msra.mxu0 0
        %464 = vmatprep.subr.bf16.mxu0 0
        %465 = vmatpush1.bf16.msra.mxu0 0
        %466 = vmatprep.subr.bf16.mxu0 0
        %467 = vmatpush1.bf16.msra.mxu0 0
        %468 = vmatprep.subr.bf16.mxu0 0
        %469 = vmatpush1.bf16.msra.mxu0 0
        %470 = vmatprep.subr.bf16.mxu0 0
        %471 = vmatpush1.bf16.msra.mxu0 0
        %472 = vmatprep.subr.bf16.mxu0 0
        %473 = vmatpush1.bf16.msra.mxu0 0
        %474 = vmatprep.subr.bf16.mxu0 0
        %475 = vmatpush1.bf16.msra.mxu0 0
        %476 = vmatprep.mubr.bf16.mxu0 0
        %477 = vmatmul.mubr.bf16.gmra.mrb[0].mxu0 %v442
        %v478 = vpop.f32.mrb[0].mxu0
        %v479 = vadd.f32 %v412, %v478
        %v480 = vpop.f32.mrb[0].mxu0
        %v481 = vpop.f32.mrb[0].mxu0
        %v482 = vadd.f32 %v415, %v481
        %v483 = vpop.f32.mrb[0].mxu0
        %484 = vdwg.mxu0
        %s485 = scalar_lea.vmem [#allocation2], 64
        %v486 = vld [vmem:[%s485] sm:$0xf]
        %v487 = vld [vmem:[%s485 + $0x4] sm:$0xf]
        %v488 = vld [vmem:[%s485 + $0x8] sm:$0xf]
        %v489 = vld [vmem:[%s485 + $0xc] sm:$0xf]
        %v490 = vld [vmem:[%s485 + $0x10] sm:$0xf]
        %v491 = vld [vmem:[%s485 + $0x14] sm:$0xf]
        %v492 = vld [vmem:[%s485 + $0x18] sm:$0xf]
        %v493 = vld [vmem:[%s485 + $0x1c] sm:$0xf]
        %vm494 = vcmask 1046528
        %v495 = vrot.slane %v334, 1
        %v496 = vrot.slane %v335, 1
        %v497 = vsel %vm494, %v495, %v496
        %v506 = vunpack.c.l.b16 %v486
        %v507 = vunpack.c.l.b16 %v487
        %v508 = vunpack.c.l.b16 %v488
        %v509 = vunpack.c.l.b16 %v489
        %v510 = vunpack.c.l.b16 %v490
        %v511 = vunpack.c.l.b16 %v491
        %v512 = vunpack.c.l.b16 %v492
        %v513 = vunpack.c.l.b16 %v493
        %v514 = vpack.c.b16 %v507, %v506
        %v515 = vpack.c.b16 %v509, %v508
        %v516 = vpack.c.b16 %v511, %v510
        %v517 = vpack.c.b16 %v513, %v512
        %v523 = vsel %vm373, %v497, 0
        %525 = vmatprep.subr.bf16.mxu0 0
        %526 = vmatpush1.bf16.msra.mxu0 %v514
        %527 = vmatprep.subr.bf16.mxu0 0
        %528 = vmatpush1.bf16.msra.mxu0 %v515
        %529 = vmatprep.subr.bf16.mxu0 0
        %530 = vmatpush1.bf16.msra.mxu0 %v516
        %531 = vmatprep.subr.bf16.mxu0 0
        %532 = vmatpush1.bf16.msra.mxu0 %v517
        %533 = vmatprep.subr.bf16.mxu0 0
        %534 = vmatpush1.bf16.msra.mxu0 0
        %535 = vmatprep.subr.bf16.mxu0 0
        %536 = vmatpush1.bf16.msra.mxu0 0
        %537 = vmatprep.subr.bf16.mxu0 0
        %538 = vmatpush1.bf16.msra.mxu0 0
        %539 = vmatprep.subr.bf16.mxu0 0
        %540 = vmatpush1.bf16.msra.mxu0 0
        %541 = vmatprep.subr.bf16.mxu0 0
        %542 = vmatpush1.bf16.msra.mxu0 0
        %543 = vmatprep.subr.bf16.mxu0 0
        %544 = vmatpush1.bf16.msra.mxu0 0
        %545 = vmatprep.subr.bf16.mxu0 0
        %546 = vmatpush1.bf16.msra.mxu0 0
        %547 = vmatprep.subr.bf16.mxu0 0
        %548 = vmatpush1.bf16.msra.mxu0 0
        %549 = vmatprep.subr.bf16.mxu0 0
        %550 = vmatpush1.bf16.msra.mxu0 0
        %551 = vmatprep.subr.bf16.mxu0 0
        %552 = vmatpush1.bf16.msra.mxu0 0
        %553 = vmatprep.subr.bf16.mxu0 0
        %554 = vmatpush1.bf16.msra.mxu0 0
        %555 = vmatprep.subr.bf16.mxu0 0
        %556 = vmatpush1.bf16.msra.mxu0 0
        %557 = vmatprep.mubr.bf16.mxu0 0
        %558 = vmatmul.mubr.bf16.gmra.mrb[0].mxu0 %v523
        %v559 = vpop.f32.mrb[0].mxu0
        %v560 = vadd.f32 0.0, %v559
        %v561 = vpop.f32.mrb[0].mxu0
        %v562 = vpop.f32.mrb[0].mxu0
        %v563 = vadd.f32 0.0, %v562
        %v564 = vpop.f32.mrb[0].mxu0
        %565 = vdwg.mxu0
        %v566 = vadd.f32 %v479, %v560
        %v567 = vadd.f32 %v482, %v563
        %v568 = vld [vmem:[%s2] sm:$0x1]
        %v570 = vlaneseq
        %v571 = vshrl.u32 %v570, 7
        %v572 = vsub.s32 0, %v571
        %v573 = vrot.slane %v568, %v572
        %v575 = vadd.f32 %v566, %v573
        %v576 = vadd.f32 %v567, %v573
        %v577 = vmax.f32 %v575, 0.0
        %v578 = vmax.f32 %v576, 0.0
        %v579 = vpack.c.bf16 %v578, %v577
        %v581 = vshrl.u32 %v579, 16
        %v583 = vrot.slane %v581, 7
        %v584 = vshll.u32 %v579, 16
        %v586 = vor.u32 %v583, %v584
        %vm589 = vcmask 1040384
        %vm590 = vsmask.f32 256
        %vm591 = vmand %vm589, %vm590
        %v592 = vsel %vm591, 0, %v586
        %v593 = vsel %vm591, %v583, 0
        %v594 = vld [vmem:[#allocation5] sm:$0xf]
        %v595 = vld [vmem:[#allocation5 + $0x4] sm:$0xf]
        %v596 = vld [vmem:[#allocation5 + $0x8] sm:$0xf]
        %v597 = vld [vmem:[#allocation5 + $0xc] sm:$0xf]
        %v598 = vld [vmem:[#allocation5 + $0x10] sm:$0xf]
        %v599 = vld [vmem:[#allocation5 + $0x14] sm:$0xf]
        %v600 = vld [vmem:[#allocation5 + $0x18] sm:$0xf]
        %v601 = vld [vmem:[#allocation5 + $0x1c] sm:$0xf]
        %v602 = vld [vmem:[#allocation5 + $0x20] sm:$0xf]
        %v603 = vld [vmem:[#allocation5 + $0x24] sm:$0xf]
        %v604 = vld [vmem:[#allocation5 + $0x28] sm:$0xf]
        %v605 = vld [vmem:[#allocation5 + $0x2c] sm:$0xf]
        %v606 = vld [vmem:[#allocation5 + $0x30] sm:$0xf]
        %v607 = vld [vmem:[#allocation5 + $0x34] sm:$0xf]
        %v608 = vld [vmem:[#allocation5 + $0x38] sm:$0xf]
        %v609 = vld [vmem:[#allocation5 + $0x3c] sm:$0xf]
        %s610 = scalar_lea.vmem [#allocation5], 64
        %v611 = vld [vmem:[%s610] sm:$0xf]
        %v612 = vld [vmem:[%s610 + $0x4] sm:$0xf]
        %v613 = vld [vmem:[%s610 + $0x8] sm:$0xf]
        %v614 = vld [vmem:[%s610 + $0xc] sm:$0xf]
        %v615 = vld [vmem:[%s610 + $0x10] sm:$0xf]
        %v616 = vld [vmem:[%s610 + $0x14] sm:$0xf]
        %v617 = vld [vmem:[%s610 + $0x18] sm:$0xf]
        %v618 = vld [vmem:[%s610 + $0x1c] sm:$0xf]
        %v619 = vld [vmem:[%s610 + $0x20] sm:$0xf]
        %v620 = vld [vmem:[%s610 + $0x24] sm:$0xf]
        %v621 = vld [vmem:[%s610 + $0x28] sm:$0xf]
        %v622 = vld [vmem:[%s610 + $0x2c] sm:$0xf]
        %v623 = vld [vmem:[%s610 + $0x30] sm:$0xf]
        %v624 = vld [vmem:[%s610 + $0x34] sm:$0xf]
        %v625 = vld [vmem:[%s610 + $0x38] sm:$0xf]
        %v626 = vld [vmem:[%s610 + $0x3c] sm:$0xf]
        %v628 = vshrl.u32 %v592, 16
        %v630 = vshll.u32 %v592, 16
        %v632 = vrot.slane %v630, 1
        %v633 = vor.u32 %v628, %v632
        %v635 = vshll.u32 %v593, 16
        %v637 = vrot.slane %v635, 1
        %v638 = vsel %vm336, %v633, %v637
        %v656 = vunpack.c.l.b16 %v611
        %v657 = vunpack.c.l.b16 %v612
        %v658 = vunpack.c.l.b16 %v613
        %v659 = vunpack.c.l.b16 %v614
        %v660 = vunpack.c.l.b16 %v615
        %v661 = vunpack.c.l.b16 %v616
        %v662 = vunpack.c.l.b16 %v617
        %v663 = vunpack.c.l.b16 %v618
        %v664 = vunpack.c.l.b16 %v619
        %v665 = vunpack.c.l.b16 %v620
        %v666 = vunpack.c.l.b16 %v621
        %v667 = vunpack.c.l.b16 %v622
        %v668 = vunpack.c.l.b16 %v623
        %v669 = vunpack.c.l.b16 %v624
        %v670 = vunpack.c.l.b16 %v625
        %v671 = vunpack.c.l.b16 %v626
        %v672 = vpack.c.b16 %v657, %v656
        %v673 = vpack.c.b16 %v659, %v658
        %v674 = vpack.c.b16 %v661, %v660
        %v675 = vpack.c.b16 %v663, %v662
        %v676 = vpack.c.b16 %v665, %v664
        %v677 = vpack.c.b16 %v667, %v666
        %v678 = vpack.c.b16 %v669, %v668
        %v679 = vpack.c.b16 %v671, %v670
        %688 = vmatprep.subr.bf16.mxu0 0
        %689 = vmatpush1.bf16.msra.mxu0 %v672
        %690 = vmatprep.subr.bf16.mxu0 0
        %691 = vmatpush1.bf16.msra.mxu0 %v673
        %692 = vmatprep.subr.bf16.mxu0 0
        %693 = vmatpush1.bf16.msra.mxu0 %v674
        %694 = vmatprep.subr.bf16.mxu0 0
        %695 = vmatpush1.bf16.msra.mxu0 %v675
        %696 = vmatprep.subr.bf16.mxu0 0
        %697 = vmatpush1.bf16.msra.mxu0 %v676
        %698 = vmatprep.subr.bf16.mxu0 0
        %699 = vmatpush1.bf16.msra.mxu0 %v677
        %700 = vmatprep.subr.bf16.mxu0 0
        %701 = vmatpush1.bf16.msra.mxu0 %v678
        %702 = vmatprep.subr.bf16.mxu0 0
        %703 = vmatpush1.bf16.msra.mxu0 %v679
        %704 = vmatprep.subr.bf16.mxu0 0
        %705 = vmatpush1.bf16.msra.mxu0 0
        %706 = vmatprep.subr.bf16.mxu0 0
        %707 = vmatpush1.bf16.msra.mxu0 0
        %708 = vmatprep.subr.bf16.mxu0 0
        %709 = vmatpush1.bf16.msra.mxu0 0
        %710 = vmatprep.subr.bf16.mxu0 0
        %711 = vmatpush1.bf16.msra.mxu0 0
        %712 = vmatprep.subr.bf16.mxu0 0
        %713 = vmatpush1.bf16.msra.mxu0 0
        %714 = vmatprep.subr.bf16.mxu0 0
        %715 = vmatpush1.bf16.msra.mxu0 0
        %716 = vmatprep.subr.bf16.mxu0 0
        %717 = vmatpush1.bf16.msra.mxu0 0
        %718 = vmatprep.subr.bf16.mxu0 0
        %719 = vmatpush1.bf16.msra.mxu0 0
        %720 = vmatprep.mubr.bf16.mxu0 0
        %721 = vmatmul.mubr.bf16.gmra.mrb[0].mxu0 %v638
        %v722 = vpop.f32.mrb[0].mxu0
        %v723 = vadd.f32 0.0, %v722
        %v724 = vpop.f32.mrb[0].mxu0
        %v725 = vpop.f32.mrb[0].mxu0
        %v726 = vadd.f32 0.0, %v725
        %v727 = vpop.f32.mrb[0].mxu0
        %728 = vdwg.mxu0
        %v745 = vunpack.c.l.b16 %v594
        %v746 = vunpack.c.l.b16 %v595
        %v747 = vunpack.c.l.b16 %v596
        %v748 = vunpack.c.l.b16 %v597
        %v749 = vunpack.c.l.b16 %v598
        %v750 = vunpack.c.l.b16 %v599
        %v751 = vunpack.c.l.b16 %v600
        %v752 = vunpack.c.l.b16 %v601
        %v753 = vunpack.c.l.b16 %v602
        %v754 = vunpack.c.l.b16 %v603
        %v755 = vunpack.c.l.b16 %v604
        %v756 = vunpack.c.l.b16 %v605
        %v757 = vunpack.c.l.b16 %v606
        %v758 = vunpack.c.l.b16 %v607
        %v759 = vunpack.c.l.b16 %v608
        %v760 = vunpack.c.l.b16 %v609
        %v761 = vpack.c.b16 %v746, %v745
        %v762 = vpack.c.b16 %v748, %v747
        %v763 = vpack.c.b16 %v750, %v749
        %v764 = vpack.c.b16 %v752, %v751
        %v765 = vpack.c.b16 %v754, %v753
        %v766 = vpack.c.b16 %v756, %v755
        %v767 = vpack.c.b16 %v758, %v757
        %v768 = vpack.c.b16 %v760, %v759
        %777 = vmatprep.subr.bf16.mxu0 0
        %778 = vmatpush1.bf16.msra.mxu0 %v761
        %779 = vmatprep.subr.bf16.mxu0 0
        %780 = vmatpush1.bf16.msra.mxu0 %v762
        %781 = vmatprep.subr.bf16.mxu0 0
        %782 = vmatpush1.bf16.msra.mxu0 %v763
        %783 = vmatprep.subr.bf16.mxu0 0
        %784 = vmatpush1.bf16.msra.mxu0 %v764
        %785 = vmatprep.subr.bf16.mxu0 0
        %786 = vmatpush1.bf16.msra.mxu0 %v765
        %787 = vmatprep.subr.bf16.mxu0 0
        %788 = vmatpush1.bf16.msra.mxu0 %v766
        %789 = vmatprep.subr.bf16.mxu0 0
        %790 = vmatpush1.bf16.msra.mxu0 %v767
        %791 = vmatprep.subr.bf16.mxu0 0
        %792 = vmatpush1.bf16.msra.mxu0 %v768
        %793 = vmatprep.subr.bf16.mxu0 0
        %794 = vmatpush1.bf16.msra.mxu0 0
        %795 = vmatprep.subr.bf16.mxu0 0
        %796 = vmatpush1.bf16.msra.mxu0 0
        %797 = vmatprep.subr.bf16.mxu0 0
        %798 = vmatpush1.bf16.msra.mxu0 0
        %799 = vmatprep.subr.bf16.mxu0 0
        %800 = vmatpush1.bf16.msra.mxu0 0
        %801 = vmatprep.subr.bf16.mxu0 0
        %802 = vmatpush1.bf16.msra.mxu0 0
        %803 = vmatprep.subr.bf16.mxu0 0
        %804 = vmatpush1.bf16.msra.mxu0 0
        %805 = vmatprep.subr.bf16.mxu0 0
        %806 = vmatpush1.bf16.msra.mxu0 0
        %807 = vmatprep.subr.bf16.mxu0 0
        %808 = vmatpush1.bf16.msra.mxu0 0
        %809 = vmatprep.mubr.bf16.mxu0 0
        %810 = vmatmul.mubr.bf16.gmra.mrb[0].mxu0 %v592
        %v811 = vpop.f32.mrb[0].mxu0
        %v812 = vadd.f32 %v723, %v811
        %v813 = vpop.f32.mrb[0].mxu0
        %v814 = vpop.f32.mrb[0].mxu0
        %v815 = vadd.f32 %v726, %v814
        %v816 = vpop.f32.mrb[0].mxu0
        %817 = vdwg.mxu0
        %s818 = scalar_lea.vmem [#allocation5], 128
        %v819 = vld [vmem:[%s818] sm:$0xf]
        %v820 = vld [vmem:[%s818 + $0x4] sm:$0xf]
        %v821 = vld [vmem:[%s818 + $0x8] sm:$0xf]
        %v822 = vld [vmem:[%s818 + $0xc] sm:$0xf]
        %v823 = vld [vmem:[%s818 + $0x10] sm:$0xf]
        %v824 = vld [vmem:[%s818 + $0x14] sm:$0xf]
        %v825 = vld [vmem:[%s818 + $0x18] sm:$0xf]
        %v826 = vld [vmem:[%s818 + $0x1c] sm:$0xf]
        %v827 = vld [vmem:[%s818 + $0x20] sm:$0xf]
        %v828 = vld [vmem:[%s818 + $0x24] sm:$0xf]
        %v829 = vld [vmem:[%s818 + $0x28] sm:$0xf]
        %v830 = vld [vmem:[%s818 + $0x2c] sm:$0xf]
        %v831 = vld [vmem:[%s818 + $0x30] sm:$0xf]
        %v832 = vld [vmem:[%s818 + $0x34] sm:$0xf]
        %v833 = vld [vmem:[%s818 + $0x38] sm:$0xf]
        %v834 = vld [vmem:[%s818 + $0x3c] sm:$0xf]
        %v837 = vrot.slane %v592, 1
        %v838 = vrot.slane %v593, 1
        %v839 = vsel %vm494, %v837, %v838
        %v857 = vunpack.c.l.b16 %v819
        %v858 = vunpack.c.l.b16 %v820
        %v859 = vunpack.c.l.b16 %v821
        %v860 = vunpack.c.l.b16 %v822
        %v861 = vunpack.c.l.b16 %v823
        %v862 = vunpack.c.l.b16 %v824
        %v863 = vunpack.c.l.b16 %v825
        %v864 = vunpack.c.l.b16 %v826
        %v865 = vunpack.c.l.b16 %v827
        %v866 = vunpack.c.l.b16 %v828
        %v867 = vunpack.c.l.b16 %v829
        %v868 = vunpack.c.l.b16 %v830
        %v869 = vunpack.c.l.b16 %v831
        %v870 = vunpack.c.l.b16 %v832
        %v871 = vunpack.c.l.b16 %v833
        %v872 = vunpack.c.l.b16 %v834
        %v873 = vpack.c.b16 %v858, %v857
        %v874 = vpack.c.b16 %v860, %v859
        %v875 = vpack.c.b16 %v862, %v861
        %v876 = vpack.c.b16 %v864, %v863
        %v877 = vpack.c.b16 %v866, %v865
        %v878 = vpack.c.b16 %v868, %v867
        %v879 = vpack.c.b16 %v870, %v869
        %v880 = vpack.c.b16 %v872, %v871
        %889 = vmatprep.subr.bf16.mxu0 0
        %890 = vmatpush1.bf16.msra.mxu0 %v873
        %891 = vmatprep.subr.bf16.mxu0 0
        %892 = vmatpush1.bf16.msra.mxu0 %v874
        %893 = vmatprep.subr.bf16.mxu0 0
        %894 = vmatpush1.bf16.msra.mxu0 %v875
        %895 = vmatprep.subr.bf16.mxu0 0
        %896 = vmatpush1.bf16.msra.mxu0 %v876
        %897 = vmatprep.subr.bf16.mxu0 0
        %898 = vmatpush1.bf16.msra.mxu0 %v877
        %899 = vmatprep.subr.bf16.mxu0 0
        %900 = vmatpush1.bf16.msra.mxu0 %v878
        %901 = vmatprep.subr.bf16.mxu0 0
        %902 = vmatpush1.bf16.msra.mxu0 %v879
        %903 = vmatprep.subr.bf16.mxu0 0
        %904 = vmatpush1.bf16.msra.mxu0 %v880
        %905 = vmatprep.subr.bf16.mxu0 0
        %906 = vmatpush1.bf16.msra.mxu0 0
        %907 = vmatprep.subr.bf16.mxu0 0
        %908 = vmatpush1.bf16.msra.mxu0 0
        %909 = vmatprep.subr.bf16.mxu0 0
        %910 = vmatpush1.bf16.msra.mxu0 0
        %911 = vmatprep.subr.bf16.mxu0 0
        %912 = vmatpush1.bf16.msra.mxu0 0
        %913 = vmatprep.subr.bf16.mxu0 0
        %914 = vmatpush1.bf16.msra.mxu0 0
        %915 = vmatprep.subr.bf16.mxu0 0
        %916 = vmatpush1.bf16.msra.mxu0 0
        %917 = vmatprep.subr.bf16.mxu0 0
        %918 = vmatpush1.bf16.msra.mxu0 0
        %919 = vmatprep.subr.bf16.mxu0 0
        %920 = vmatpush1.bf16.msra.mxu0 0
        %921 = vmatprep.mubr.bf16.mxu0 0
        %922 = vmatmul.mubr.bf16.gmra.mrb[0].mxu0 %v839
        %v923 = vpop.f32.mrb[0].mxu0
        %v924 = vadd.f32 0.0, %v923
        %v925 = vpop.f32.mrb[0].mxu0
        %v926 = vpop.f32.mrb[0].mxu0
        %v927 = vadd.f32 0.0, %v926
        %v928 = vpop.f32.mrb[0].mxu0
        %929 = vdwg.mxu0
        %v930 = vadd.f32 %v812, %v924
        %v931 = vadd.f32 %v815, %v927
        %v932 = vld [vmem:[%s4] sm:$0x1]
        %v934 = vlaneseq
        %v935 = vshrl.u32 %v934, 7
        %v936 = vsub.s32 0, %v935
        %v937 = vrot.slane %v932, %v936
        %v939 = vadd.f32 %v930, %v937
        %v940 = vadd.f32 %v931, %v937
        %v941 = vmax.f32 %v939, 0.0
        %v942 = vmax.f32 %v940, 0.0
        %v943 = vld [vmem:[%s5] sm:$0xf]
        %v944 = vld [vmem:[%s5 + $0x4] sm:$0xf]
        %v945 = vld [vmem:[%s5 + $0x8] sm:$0xf]
        %v946 = vld [vmem:[%s5 + $0xc] sm:$0xf]
        %v947 = vld [vmem:[%s5 + $0x10] sm:$0xf]
        %v948 = vld [vmem:[%s5 + $0x14] sm:$0xf]
        %v949 = vld [vmem:[%s5 + $0x18] sm:$0xf]
        %v950 = vld [vmem:[%s5 + $0x1c] sm:$0xf]
        %v951 = vld [vmem:[%s6] sm:$0x1]
        %v953 = vlaneseq
        %v954 = vshrl.u32 %v953, 7
        %v955 = vsub.s32 0, %v954
        %v956 = vrot.slane %v951, %v955
        %v966 = vunpack.c.l.b16 %v943
        %v967 = vunpack.c.l.b16 %v944
        %v968 = vunpack.c.l.b16 %v945
        %v969 = vunpack.c.l.b16 %v946
        %v970 = vunpack.c.l.b16 %v947
        %v971 = vunpack.c.l.b16 %v948
        %v972 = vunpack.c.l.b16 %v949
        %v973 = vunpack.c.l.b16 %v950
        %v974 = vpack.c.b16 %v967, %v966
        %v975 = vpack.c.b16 %v969, %v968
        %v976 = vpack.c.b16 %v971, %v970
        %v977 = vpack.c.b16 %v973, %v972
        %982 = vmatprep.subr.bf16.mxu0 0
        %983 = vmatpush1.bf16.msra.mxu0 %v974
        %984 = vmatprep.subr.bf16.mxu0 0
        %985 = vmatpush1.bf16.msra.mxu0 %v975
        %986 = vmatprep.subr.bf16.mxu0 0
        %987 = vmatpush1.bf16.msra.mxu0 %v976
        %988 = vmatprep.subr.bf16.mxu0 0
        %989 = vmatpush1.bf16.msra.mxu0 %v977
        %990 = vmatprep.subr.bf16.mxu0 0
        %991 = vmatpush1.bf16.msra.mxu0 0
        %992 = vmatprep.subr.bf16.mxu0 0
        %993 = vmatpush1.bf16.msra.mxu0 0
        %994 = vmatprep.subr.bf16.mxu0 0
        %995 = vmatpush1.bf16.msra.mxu0 0
        %996 = vmatprep.subr.bf16.mxu0 0
        %997 = vmatpush1.bf16.msra.mxu0 0
        %998 = vmatprep.subr.bf16.mxu0 0
        %999 = vmatpush1.bf16.msra.mxu0 0
        %1000 = vmatprep.subr.bf16.mxu0 0
        %1001 = vmatpush1.bf16.msra.mxu0 0
        %1002 = vmatprep.subr.bf16.mxu0 0
        %1003 = vmatpush1.bf16.msra.mxu0 0
        %1004 = vmatprep.subr.bf16.mxu0 0
        %1005 = vmatpush1.bf16.msra.mxu0 0
        %1006 = vmatprep.subr.bf16.mxu0 0
        %1007 = vmatpush1.bf16.msra.mxu0 0
        %1008 = vmatprep.subr.bf16.mxu0 0
        %1009 = vmatpush1.bf16.msra.mxu0 0
        %1010 = vmatprep.subr.bf16.mxu0 0
        %1011 = vmatpush1.bf16.msra.mxu0 0
        %1012 = vmatprep.subr.bf16.mxu0 0
        %1013 = vmatpush1.bf16.msra.mxu0 0
        %1014 = vmatprep.mubr.bf16.mxu0 0
        %1015 = vmatmul.mubr.bf16.gmra.mrb[0].mxu0 %v375
        %v1016 = vpop.f32.mrb[0].mxu0
        %v1017 = vadd.f32 %v956, %v1016
        %v1018 = vpop.f32.mrb[0].mxu0
        %v1019 = vpop.f32.mrb[0].mxu0
        %v1020 = vadd.f32 %v956, %v1019
        %v1021 = vpop.f32.mrb[0].mxu0
        %1022 = vdwg.mxu0
        %v1023 = vadd.f32 %v941, %v1017
        %v1024 = vadd.f32 %v942, %v1020
        %v1025 = vmax.f32 %v1023, 0.0
        %v1026 = vmax.f32 %v1024, 0.0
        %1027 = vst [vmem:[%s301] sm:$0xff] %v1025
        %1028 = vst [vmem:[%s301 + $0x8] sm:$0xff] %v1026
        %s1029 = sand.u32 %s183, 1
        %s1030 = scalar_lea.sflag [#allocation4], %s1029
        %s1031 = sand.u32 %s183, 1
        %s1032 = smul.addr %s1031, 16
        %s1033 = scalar_lea.vmem [#allocation7], %s1032
        // Predicated region
        $region57: #{tpu_custom_call.1} parent=47 // pred_check
          %p1034 = pneg %p193
        $region58: #{tpu_custom_call.1} parent=47 // pred_check_branch
          %1036 = sbr.rel (%p1034) target = $region60
        $region59: #{tpu_custom_call.1} parent=47 // pred_region
          %s1038 = ssub.s32 256, 256
          %1039 = vsyncadd %s1030, %s1038
          %s1040 = smul.addr %s23, 2
          %s1041 = smul.addr %s1040, 128
          %s1042 = scalar_lea.hbm %s7, %s1041
          %s1043 = sshll.u32 %s1033, 4
          %s1044 = int_to_ptr.vmem [resolvable:$true] %s1043
          %1049 = dma.vmem_to_hbm [thread:$0]  %s1044, 256, %s1042, %s1030, 128, 128, 8
        $region60: #{tpu_custom_call.1} parent=47 // pred_fallthru
          _
      $region48: #{tpu_custom_call.1} parent=5 // pred_fallthru
        _
      %p1050 = scmp.le.s32.totalorder 2, %s18
      // Predicated region
      $region61: #{tpu_custom_call.1} parent=5 // pred_check
        %p1051 = pneg %p1050
      $region62: #{tpu_custom_call.1} parent=5 // pred_check_branch
        %1053 = sbr.rel (%p1051) target = $region64
      $region63: #{tpu_custom_call.1} parent=5 // pred_region
        %s1054 = ssub.s32 %s18, 2
        // Predicated region
        $region65: #{tpu_custom_call.1} parent=63 // pred_check
          %p1055 = pneg %p199
        $region66: #{tpu_custom_call.1} parent=63 // pred_check_branch
          %1057 = sbr.rel (%p1055) target = $region68
        $region67: #{tpu_custom_call.1} parent=63 // pred_region
          %s1058 = sand.u32 %s184, 1
          %s1059 = scalar_lea.sflag [#allocation4], %s1058
          %s1060 = sand.u32 %s184, 1
          %s1061 = smul.addr %s1060, 16
          %s1062 = scalar_lea.vmem [#allocation7], %s1061
          %1063 = dma.done %s1059, 256
        $region68: #{tpu_custom_call.1} parent=63 // pred_fallthru
          _
      $region64: #{tpu_custom_call.1} parent=5 // pred_fallthru
        _
    $region6: #{tpu_custom_call.1} parent=1 // loop_footer
      %s22 = sadd.s32 1, %s18
    $region7: #{tpu_custom_call.1} parent=1 // loop_footer_branch
      %17 = sbr.rel target = $region3
    $region8: #{tpu_custom_call.1} parent=1 // loop_exit
      _
    %1064 = vsyncpa [#allocation3], 1
    %s1065 = scalar_lea.sflag [#allocation3], 1
    %1066 = vsyncpa %s1065, 1
    %1067 = vsyncpa [#allocation6], 1
    %1068 = vsyncpa [#allocation4], 1
    %s1069 = scalar_lea.sflag [#allocation4], 1
    %1070 = vsyncpa %s1069, 1

</llo_original>
